<compile_context>
chip_gen: v7x
topology: tpu7x:2x2x1
jax: 0.10.0
libtpu: 0.0.40
codegen_flags: <defaults>
</compile_context>

<pallas_src>
import functools
import math

import jax
import jax.numpy as jnp
from jax.experimental import pallas as pl
from jax.experimental.pallas import tpu as pltpu


def cnn_word_emb_kernel(ids_ref, comb_ref, bias_ref, out_ref, *, L, V, E, C, K):
    """One word-tile: fused (one-hot @ fused-weight) MXU matmul + max-pool."""
    TW = ids_ref.shape[0]
    T = L - K + 1

    ids = ids_ref[...]                                               # (TW, L) int32

    # Hoisted lane-broadcast of each character position across the V vocab lanes.
    char_bcast = [jnp.broadcast_to(ids[:, l:l + 1], (TW, V)) for l in range(L)]

    # Windowed ids, t-major rows:  win[t*TW + w, k*V + v] = ids[w, t + k]
    win = jnp.concatenate(
        [jnp.concatenate([char_bcast[t + k] for k in range(K)], axis=1)
         for t in range(T)],
        axis=0)                                                      # (T*TW, K*V)

    # Lane-dense 2D one-hot (exact 0/1 in bf16).
    v_of_col = jax.lax.broadcasted_iota(jnp.int32, (T * TW, K * V), 1) % V
    onehot = (win == v_of_col).astype(jnp.bfloat16)                  # (T*TW, K*V)

    # Single fused MXU matmul: embedding lookup + grouped conv.
    conv = jnp.dot(onehot, comb_ref[...],
                   preferred_element_type=jnp.float32)               # (T*TW, E*C)

    # Max-pool over the conv length T: contiguous, sublane-aligned row slices.
    pooled = conv[0:TW, :]
    for t in range(1, T):
        pooled = jnp.maximum(pooled, conv[t * TW:(t + 1) * TW, :])

    out_ref[...] = pooled + bias_ref[...]                            # (TW, E*C)


def cnn_word_embedding(ids, table, wgt, bias, *, word_tile=None):
    """Pallas forward.  ids (W, L) int32 -> (W, E*C) float32.

    table: (V, E)   embedding table (row 0 = padding, zeroed)
    wgt:   (E, C, K) grouped Conv1d weight (PyTorch out-channel o = e*C + c)
    bias:  (E, C)    grouped Conv1d bias
    """
    W, L = ids.shape
    V, E = table.shape
    E2, C, K = wgt.shape
    assert E2 == E
    T = L - K + 1
    assert T >= 1

    # Fused embedding + grouped-conv weight, computed in f32, stored bf16.
    #   comb[k*V + v, e*C + c] = table[v, e] * wgt[e, c, k]
    comb = jnp.einsum("ve,eck->kvec", table, wgt).reshape(K * V, E * C)
    comb = comb.astype(jnp.bfloat16)
    bias2 = bias.reshape(1, E * C).astype(jnp.float32)

    # Word-tile selection: multiple of 8 (sublane), big enough to amortize
    # grid-step overhead / fill the MXU M dim, but >=2 grid steps when
    # possible (v7x megacore).  Fits comfortably in v7x's 64 MiB VMEM.
    if word_tile is None:
        word_tile = W
        for cand in (512, 256, 128, 64, 32, 16, 8):
            if W % cand == 0 and W >= 2 * cand:
                word_tile = cand
                break
    TW = word_tile
    assert W % TW == 0
    assert TW == W or TW % 8 == 0

    kernel = functools.partial(cnn_word_emb_kernel, L=L, V=V, E=E, C=C, K=K)
    return pl.pallas_call(
        kernel,
        out_shape=jax.ShapeDtypeStruct((W, E * C), jnp.float32),
        grid=(W // TW,),
        in_specs=[
            pl.BlockSpec((TW, L), lambda i: (i, 0)),           # ids, tiled over words
            pl.BlockSpec((K * V, E * C), lambda i: (0, 0)),    # fused weight (resident)
            pl.BlockSpec((1, E * C), lambda i: (0, 0)),        # conv bias (resident)
        ],
        out_specs=pl.BlockSpec((TW, E * C), lambda i: (i, 0)),  # lane-dense output slab
        compiler_params=pltpu.CompilerParams(
            dimension_semantics=("parallel",)),
    )(ids, comb, bias2)


def reference_forward(ids, table, wgt, bias):
    """Pure-JAX f32 reference matching the PyTorch module."""
    W, L = ids.shape
    E, C, K = wgt.shape
    T = L - K + 1
    emb = table[ids]                                   # (W, L, E)
    x = jnp.transpose(emb, (0, 2, 1))                  # (W, E, L)  == NCW
    windows = jnp.stack([x[:, :, k:k + T] for k in range(K)], axis=-1)  # (W, E, T, K)
    conv = jnp.einsum("wetk,eck->wect", windows, wgt) + bias[None, :, :, None]
    pooled = jnp.max(conv, axis=-1)                    # (W, E, C)
    return pooled.reshape(W, E * C)


if __name__ == "__main__":
    # Small, module-consistent shapes.
    W = 8      # word_count
    L = 8      # max_word_length
    E = 8      # character_embedding_dimension
    V = 40     # len(character_vocabulary)
    C = 50     # cnn_kernel_count
    K = 3      # cnn_kernel_size

    key = jax.random.PRNGKey(0)
    k_tab, k_w, k_b, k_ids = jax.random.split(key, 4)

    # Embedding init: U(-sqrt(3/E), sqrt(3/E)), row 0 (padding_idx) zeroed.
    bound_emb = math.sqrt(3.0 / E)
    table = jax.random.uniform(k_tab, (V, E), jnp.float32, -bound_emb, bound_emb)
    table = table.at[0].set(0.0)

    # Conv1d(groups=E) params: fan_in = (in_channels/groups)*K = K.
    bound_w = 1.0 / math.sqrt(K)
    wgt = jax.random.uniform(k_w, (E, C, K), jnp.float32, -bound_w, bound_w)
    bias = jax.random.uniform(k_b, (E, C), jnp.float32, -bound_w, bound_w)

    ids = jax.random.randint(k_ids, (W, L), 0, V, dtype=jnp.int32)

    out = cnn_word_embedding(ids, table, wgt, bias)
    out = jax.block_until_ready(out)

    ref = reference_forward(ids, table, wgt, bias)
    assert out.shape == (W, E * C)
    # bf16 fused weight (f32 accumulation): allow ~1e-2 vs the f32 reference.
    assert jnp.allclose(out, ref, rtol=1e-2, atol=1e-2), "mismatch vs reference"

    print("KERNEL_OK")
</pallas_src>

<mosaic_0001>
module attributes {stable_mosaic.version = 11 : i64} {
  func.func @cnn_word_emb_kernel(%arg0: i32, %arg1: memref<8x8xi32, #tpu.memory_space<vmem>>, %arg2: memref<120x400xbf16, #tpu.memory_space<vmem>>, %arg3: memref<1x400xf32, #tpu.memory_space<vmem>>, %arg4: memref<8x400xf32, #tpu.memory_space<vmem>>) attributes {dimension_semantics = [#tpu.dimension_semantics<parallel>], iteration_bounds = array<i64: 1>, scalar_prefetch = 0 : i64, scratch_operands = 0 : i64, tpu.core_type = #tpu.core_type<tc>, window_params = [{transform_indices = @transform_0, window_bounds = array<i64: 8, 8>}, {pipeline_mode = #tpu.pipeline_mode<synchronous>, transform_indices = @transform_1, window_bounds = array<i64: 120, 400>}, {pipeline_mode = #tpu.pipeline_mode<synchronous>, transform_indices = @transform_2, window_bounds = array<i64: 1, 400>}, {transform_indices = @transform_3, window_bounds = array<i64: 8, 400>}]} {
    %c0 = arith.constant 0 : index
    %c0_0 = arith.constant 0 : index
    %0 = vector.load %arg1[%c0, %c0_0] : memref<8x8xi32, #tpu.memory_space<vmem>>, vector<8x8xi32>
    %1 = vector.extract_strided_slice %0 {offsets = [0, 0], sizes = [8, 1], strides = [1, 1]} : vector<8x8xi32> to vector<8x1xi32>
    %2 = vector.shape_cast %1 : vector<8x1xi32> to vector<8x1xi32>
    %3 = vector.broadcast %2 : vector<8x1xi32> to vector<8x40xi32>
    %4 = vector.extract_strided_slice %0 {offsets = [0, 1], sizes = [8, 1], strides = [1, 1]} : vector<8x8xi32> to vector<8x1xi32>
    %5 = vector.shape_cast %4 : vector<8x1xi32> to vector<8x1xi32>
    %6 = vector.broadcast %5 : vector<8x1xi32> to vector<8x40xi32>
    %7 = vector.extract_strided_slice %0 {offsets = [0, 2], sizes = [8, 1], strides = [1, 1]} : vector<8x8xi32> to vector<8x1xi32>
    %8 = vector.shape_cast %7 : vector<8x1xi32> to vector<8x1xi32>
    %9 = vector.broadcast %8 : vector<8x1xi32> to vector<8x40xi32>
    %10 = vector.extract_strided_slice %0 {offsets = [0, 3], sizes = [8, 1], strides = [1, 1]} : vector<8x8xi32> to vector<8x1xi32>
    %11 = vector.shape_cast %10 : vector<8x1xi32> to vector<8x1xi32>
    %12 = vector.broadcast %11 : vector<8x1xi32> to vector<8x40xi32>
    %13 = vector.extract_strided_slice %0 {offsets = [0, 4], sizes = [8, 1], strides = [1, 1]} : vector<8x8xi32> to vector<8x1xi32>
    %14 = vector.shape_cast %13 : vector<8x1xi32> to vector<8x1xi32>
    %15 = vector.broadcast %14 : vector<8x1xi32> to vector<8x40xi32>
    %16 = vector.extract_strided_slice %0 {offsets = [0, 5], sizes = [8, 1], strides = [1, 1]} : vector<8x8xi32> to vector<8x1xi32>
    %17 = vector.shape_cast %16 : vector<8x1xi32> to vector<8x1xi32>
    %18 = vector.broadcast %17 : vector<8x1xi32> to vector<8x40xi32>
    %19 = vector.extract_strided_slice %0 {offsets = [0, 6], sizes = [8, 1], strides = [1, 1]} : vector<8x8xi32> to vector<8x1xi32>
    %20 = vector.shape_cast %19 : vector<8x1xi32> to vector<8x1xi32>
    %21 = vector.broadcast %20 : vector<8x1xi32> to vector<8x40xi32>
    %22 = vector.extract_strided_slice %0 {offsets = [0, 7], sizes = [8, 1], strides = [1, 1]} : vector<8x8xi32> to vector<8x1xi32>
    %23 = vector.shape_cast %22 : vector<8x1xi32> to vector<8x1xi32>
    %24 = vector.broadcast %23 : vector<8x1xi32> to vector<8x40xi32>
    %25 = tpu.concatenate %3, %6, %9 in 1 : vector<8x40xi32>, vector<8x40xi32>, vector<8x40xi32> -> vector<8x120xi32>
    %26 = tpu.concatenate %6, %9, %12 in 1 : vector<8x40xi32>, vector<8x40xi32>, vector<8x40xi32> -> vector<8x120xi32>
    %27 = tpu.concatenate %9, %12, %15 in 1 : vector<8x40xi32>, vector<8x40xi32>, vector<8x40xi32> -> vector<8x120xi32>
    %28 = tpu.concatenate %12, %15, %18 in 1 : vector<8x40xi32>, vector<8x40xi32>, vector<8x40xi32> -> vector<8x120xi32>
    %29 = tpu.concatenate %15, %18, %21 in 1 : vector<8x40xi32>, vector<8x40xi32>, vector<8x40xi32> -> vector<8x120xi32>
    %30 = tpu.concatenate %18, %21, %24 in 1 : vector<8x40xi32>, vector<8x40xi32>, vector<8x40xi32> -> vector<8x120xi32>
    %31 = tpu.concatenate %25, %26, %27, %28, %29, %30 in 0 : vector<8x120xi32>, vector<8x120xi32>, vector<8x120xi32>, vector<8x120xi32>, vector<8x120xi32>, vector<8x120xi32> -> vector<48x120xi32>
    %32 = tpu.iota {dimensions = array<i32: 1>} : vector<48x120xi32>
    %c40_i32 = arith.constant 40 : i32
    %c0_i32 = arith.constant 0 : i32
    %33 = arith.cmpi eq, %c40_i32, %c0_i32 : i32
    %c1_i32 = arith.constant 1 : i32
    %34 = arith.select %33, %c1_i32, %c40_i32 : i32
    %35 = vector.broadcast %34 : i32 to vector<48x120xi32>
    %36 = arith.remsi %32, %35 : vector<48x120xi32>
    %c0_i32_1 = arith.constant 0 : i32
    %37 = vector.broadcast %c0_i32_1 : i32 to vector<48x120xi32>
    %38 = arith.cmpi ne, %36, %37 : vector<48x120xi32>
    %c0_i32_2 = arith.constant 0 : i32
    %39 = vector.broadcast %c0_i32_2 : i32 to vector<48x120xi32>
    %40 = arith.cmpi slt, %36, %39 : vector<48x120xi32>
    %c0_i32_3 = arith.constant 0 : i32
    %41 = arith.cmpi slt, %34, %c0_i32_3 : i32
    %42 = vector.broadcast %41 : i1 to vector<48x120xi1>
    %43 = vector.broadcast %42 : vector<48x120xi1> to vector<48x120xi1>
    %44 = arith.xori %40, %43 : vector<48x120xi1>
    %45 = arith.andi %44, %38 : vector<48x120xi1>
    %46 = vector.broadcast %34 : i32 to vector<48x120xi32>
    %47 = arith.addi %36, %46 : vector<48x120xi32>
    %48 = arith.select %45, %47, %36 : vector<48x120xi1>, vector<48x120xi32>
    %49 = arith.cmpi eq, %31, %48 : vector<48x120xi32>
    %50 = arith.extui %49 : vector<48x120xi1> to vector<48x120xi32>
    %51 = arith.sitofp %50 : vector<48x120xi32> to vector<48x120xf32>
    %52 = arith.truncf %51 : vector<48x120xf32> to vector<48x120xbf16>
    %c0_4 = arith.constant 0 : index
    %c0_5 = arith.constant 0 : index
    %53 = vector.load %arg2[%c0_4, %c0_5] : memref<120x400xbf16, #tpu.memory_space<vmem>>, vector<120x400xbf16>
    %cst = arith.constant dense<0.000000e+00> : vector<48x400xf32>
    %54 = tpu.matmul %52, %53, %cst {dimension_numbers = #tpu.dot_dimension_numbers<[1], [0], [0], [1], [0, 0, 1, 1], [], []>} : vector<48x120xbf16>, vector<120x400xbf16>, vector<48x400xf32> -> vector<48x400xf32>
    %55 = vector.extract_strided_slice %54 {offsets = [0, 0], sizes = [8, 400], strides = [1, 1]} : vector<48x400xf32> to vector<8x400xf32>
    %56 = vector.extract_strided_slice %54 {offsets = [8, 0], sizes = [8, 400], strides = [1, 1]} : vector<48x400xf32> to vector<8x400xf32>
    %57 = arith.maximumf %55, %56 : vector<8x400xf32>
    %58 = vector.extract_strided_slice %54 {offsets = [16, 0], sizes = [8, 400], strides = [1, 1]} : vector<48x400xf32> to vector<8x400xf32>
    %59 = arith.maximumf %57, %58 : vector<8x400xf32>
    %60 = vector.extract_strided_slice %54 {offsets = [24, 0], sizes = [8, 400], strides = [1, 1]} : vector<48x400xf32> to vector<8x400xf32>
    %61 = arith.maximumf %59, %60 : vector<8x400xf32>
    %62 = vector.extract_strided_slice %54 {offsets = [32, 0], sizes = [8, 400], strides = [1, 1]} : vector<48x400xf32> to vector<8x400xf32>
    %63 = arith.maximumf %61, %62 : vector<8x400xf32>
    %64 = vector.extract_strided_slice %54 {offsets = [40, 0], sizes = [8, 400], strides = [1, 1]} : vector<48x400xf32> to vector<8x400xf32>
    %65 = arith.maximumf %63, %64 : vector<8x400xf32>
    %c0_6 = arith.constant 0 : index
    %c0_7 = arith.constant 0 : index
    %66 = vector.load %arg3[%c0_6, %c0_7] : memref<1x400xf32, #tpu.memory_space<vmem>>, vector<1x400xf32>
    %67 = vector.broadcast %66 : vector<1x400xf32> to vector<8x400xf32>
    %68 = arith.addf %65, %67 : vector<8x400xf32>
    %c0_8 = arith.constant 0 : index
    %c0_9 = arith.constant 0 : index
    %69 = vector.load %arg4[%c0_8, %c0_9] : memref<8x400xf32, #tpu.memory_space<vmem>>, vector<8x400xf32>
    tpu.vector_store %arg4[%c0_8, %c0_9], %68 {strides = array<i32>} : memref<8x400xf32, #tpu.memory_space<vmem>>, vector<8x400xf32>,
    return
  }
  func.func @transform_0(%arg0: i32) -> (i32, i32) {
    %c0_i32 = arith.constant 0 : i32
    %c0_i32_0 = arith.constant 0 : i32
    return %arg0, %c0_i32 : i32, i32
  }
  func.func @transform_1(%arg0: i32) -> (i32, i32) {
    %c0_i32 = arith.constant 0 : i32
    %c0_i32_0 = arith.constant 0 : i32
    %c0_i32_1 = arith.constant 0 : i32
    return %c0_i32, %c0_i32_0 : i32, i32
  }
  func.func @transform_2(%arg0: i32) -> (i32, i32) {
    %c0_i32 = arith.constant 0 : i32
    %c0_i32_0 = arith.constant 0 : i32
    %c0_i32_1 = arith.constant 0 : i32
    return %c0_i32, %c0_i32_0 : i32, i32
  }
  func.func @transform_3(%arg0: i32) -> (i32, i32) {
    %c0_i32 = arith.constant 0 : i32
    %c0_i32_0 = arith.constant 0 : i32
    return %arg0, %c0_i32 : i32, i32
  }
}

</mosaic_0001>

<llo_original>
// kernel: tpu_custom_call.1
$region0: #{tpu_custom_call.1}
  #allocation0 [shape = 'u32[]', space=smem, size = 0x4, offset = 0x4, fixed_abs, tag = 'smem constant byte address 0x4 - core index']
  #allocation1 [shape = 'u32[144,128]{1,0:T(1,128)}', space=vmem, size = 0x12000, scoped, tag = 'internal scratch']
  %s0 = inlined_call_operand.vmem [shape: s32[8,8], index: 0, kind: input, shape index: {}]
  %s1 = inlined_call_operand.vmem [shape: bf16[120,400], index: 1, kind: input, shape index: {}]
  %s2 = inlined_call_operand.vmem [shape: f32[1,400], index: 2, kind: input, shape index: {}]
  %s3 = inlined_call_operand.hbm [shape: f32[8,400], index: 3, kind: output, shape index: {}]
  %s4 = sld [smem:[#allocation0]]
  $region22: #{tpu_custom_call.1} parent=0
    _
  %s6 = ssub.s32 1, %s4
  %s7 = scalar_select 0, %s6, %s4
  $region1: #{tpu_custom_call.1} parent=0
    #allocation2 [shape = 'u8[16384]{0}', space=vmem, size = 0x4000, scoped, tag = 'output window, operand 0, single buffered']
    #allocation3 [shape = 's32[1]{0}', space=sflag, size = 0x4, scoped, tag = 'scoped memory for tpu_custom_call.1']
    %8 = vsyncpa [#allocation3], 0
    // Predicated region
    $region2: #{tpu_custom_call.1} parent=1 // pred_check
      _
    $region3: #{tpu_custom_call.1} parent=1 // pred_check_branch
      %10 = sbr.rel (0) target = $region5
    $region4: #{tpu_custom_call.1} parent=1 // pred_region
      _
    $region5: #{tpu_custom_call.1} parent=1 // pred_fallthru
      _
    // Predicated region
    $region6: #{tpu_custom_call.1} parent=1 // pred_check
      _
    $region7: #{tpu_custom_call.1} parent=1 // pred_check_branch
      %12 = sbr.rel (0) target = $region9
    $region8: #{tpu_custom_call.1} parent=1 // pred_region
      _
    $region9: #{tpu_custom_call.1} parent=1 // pred_fallthru
      _
    // Predicated region
    $region10: #{tpu_custom_call.1} parent=1 // pred_check
      _
    $region11: #{tpu_custom_call.1} parent=1 // pred_check_branch
      %14 = sbr.rel (0) target = $region13
    $region12: #{tpu_custom_call.1} parent=1 // pred_region
      _
    $region13: #{tpu_custom_call.1} parent=1 // pred_fallthru
      _
    %v16 = vld [vmem:[%s0] sm:$0xff]
    %17 = vset.pattern.permute.xlu0 0
    %18 = vperm.xlu0 %17, %v16
    %v19 = vpop.permute.xlu0 %18
    %20 = vset.pattern.permute.xlu0 1
    %21 = vperm.xlu0 %20, %v16
    %v22 = vpop.permute.xlu0 %21
    %23 = vset.pattern.permute.xlu0 2
    %24 = vperm.xlu0 %23, %v16
    %v25 = vpop.permute.xlu0 %24
    %26 = vset.pattern.permute.xlu0 3
    %27 = vperm.xlu0 %26, %v16
    %v28 = vpop.permute.xlu0 %27
    %29 = vset.pattern.permute.xlu0 4
    %30 = vperm.xlu0 %29, %v16
    %v31 = vpop.permute.xlu0 %30
    %32 = vset.pattern.permute.xlu0 5
    %33 = vperm.xlu0 %32, %v16
    %v34 = vpop.permute.xlu0 %33
    %35 = vset.pattern.permute.xlu0 6
    %36 = vperm.xlu0 %35, %v16
    %v37 = vpop.permute.xlu0 %36
    %38 = vset.pattern.permute.xlu0 7
    %39 = vperm.xlu0 %38, %v16
    %v40 = vpop.permute.xlu0 %39
    %vm41 = vcmask 326656
    %v42 = vsel %vm41, %v19, %v22
    %vm43 = vcmask 654336
    %v44 = vsel %vm43, %v42, %v25
    %v45 = vsel %vm41, %v22, %v25
    %v46 = vsel %vm43, %v45, %v28
    %v47 = vsel %vm41, %v25, %v28
    %v48 = vsel %vm43, %v47, %v31
    %v49 = vsel %vm41, %v28, %v31
    %v50 = vsel %vm43, %v49, %v34
    %v51 = vsel %vm41, %v31, %v34
    %v52 = vsel %vm43, %v51, %v37
    %v53 = vsel %vm41, %v34, %v37
    %v54 = vsel %vm43, %v53, %v40
    %v55 = vlaneseq
    %v56 = vand.u32 %v55, 127
    %vm57 = vcmp.lt.s32.totalorder %v56, 0
    %v58 = vsub.s32 0, %v56
    %v59 = vsel %vm57, %v58, %v56
    %v60 = vmul.u32.u64.compose %v59, 3435973837
    %v61 = vextract.low.u32 %v60
    %v62 = vextract.high.u32 %v60
    %v63 = vshrl.u32 %v62, 5
    %v64 = vmul.u32 %v63, 40
    %v65 = vsub.s32 %v59, %v64
    %v66 = vsub.s32 0, %v65
    %v67 = vsel %vm57, %v66, %v65
    %vm68 = vcmp.ne.s32.totalorder %v67, 0
    %vm69 = vcmp.lt.s32.totalorder %v67, 0
    %vm70 = vmand %vm69, %vm68
    %v71 = vadd.s32 %v67, 40
    %v72 = vsel %vm70, %v71, %v67
    %vm73 = vcmp.eq.s32.totalorder %v44, %v72
    %vm74 = vcmp.eq.s32.totalorder %v46, %v72
    %vm75 = vcmp.eq.s32.totalorder %v48, %v72
    %vm76 = vcmp.eq.s32.totalorder %v50, %v72
    %vm77 = vcmp.eq.s32.totalorder %v52, %v72
    %vm78 = vcmp.eq.s32.totalorder %v54, %v72
    %v79 = vsel %vm73, 1, 0
    %v80 = vsel %vm74, 1, 0
    %v81 = vsel %vm75, 1, 0
    %v82 = vsel %vm76, 1, 0
    %v83 = vsel %vm77, 1, 0
    %v84 = vsel %vm78, 1, 0
    %v85 = vcvt.s32.f32 %v79
    %v86 = vcvt.s32.f32 %v80
    %v87 = vcvt.s32.f32 %v81
    %v88 = vcvt.s32.f32 %v82
    %v89 = vcvt.s32.f32 %v83
    %v90 = vcvt.s32.f32 %v84
    %v91 = vpack.c.bf16 %v86, %v85
    %v92 = vpack.c.bf16 %v88, %v87
    %v93 = vpack.c.bf16 %v90, %v89
    %v94 = vld [vmem:[%s1] sm:$0xff]
    %v95 = vld [vmem:[%s1 + $0x8] sm:$0xff]
    %v96 = vld [vmem:[%s1 + $0x10] sm:$0xff]
    %v97 = vld [vmem:[%s1 + $0x18] sm:$0xff]
    %v98 = vld [vmem:[%s1 + $0x20] sm:$0xff]
    %v99 = vld [vmem:[%s1 + $0x28] sm:$0xff]
    %v100 = vld [vmem:[%s1 + $0x30] sm:$0xff]
    %v101 = vld [vmem:[%s1 + $0x38] sm:$0xff]
    %v102 = vld [vmem:[%s1 + $0x40] sm:$0xff]
    %v103 = vld [vmem:[%s1 + $0x48] sm:$0xff]
    %v104 = vld [vmem:[%s1 + $0x50] sm:$0xff]
    %v105 = vld [vmem:[%s1 + $0x58] sm:$0xff]
    %v106 = vld [vmem:[%s1 + $0x60] sm:$0xff]
    %v107 = vld [vmem:[%s1 + $0x68] sm:$0xff]
    %v108 = vld [vmem:[%s1 + $0x70] sm:$0xff]
    %v109 = vld [vmem:[%s1 + $0x78] sm:$0xff]
    %v110 = vld [vmem:[%s1 + $0x80] sm:$0xff]
    %v111 = vld [vmem:[%s1 + $0x88] sm:$0xff]
    %v112 = vld [vmem:[%s1 + $0x90] sm:$0xff]
    %v113 = vld [vmem:[%s1 + $0x98] sm:$0xff]
    %v114 = vld [vmem:[%s1 + $0xa0] sm:$0xff]
    %v115 = vld [vmem:[%s1 + $0xa8] sm:$0xff]
    %v116 = vld [vmem:[%s1 + $0xb0] sm:$0xff]
    %v117 = vld [vmem:[%s1 + $0xb8] sm:$0xff]
    %v118 = vld [vmem:[%s1 + $0xc0] sm:$0xff]
    %v119 = vld [vmem:[%s1 + $0xc8] sm:$0xff]
    %v120 = vld [vmem:[%s1 + $0xd0] sm:$0xff]
    %v121 = vld [vmem:[%s1 + $0xd8] sm:$0xff]
    %v122 = vld [vmem:[%s1 + $0xe0] sm:$0xff]
    %v123 = vld [vmem:[%s1 + $0xe8] sm:$0xff]
    %v154 = vunpack.c.l.b16 %v94
    %v155 = vunpack.c.h.b16 %v94
    %v156 = vunpack.c.l.b16 %v95
    %v157 = vunpack.c.h.b16 %v95
    %v158 = vunpack.c.l.b16 %v96
    %v159 = vunpack.c.h.b16 %v96
    %v160 = vunpack.c.l.b16 %v97
    %v161 = vunpack.c.h.b16 %v97
    %v162 = vunpack.c.l.b16 %v98
    %v163 = vunpack.c.h.b16 %v98
    %v164 = vunpack.c.l.b16 %v99
    %v165 = vunpack.c.h.b16 %v99
    %v166 = vunpack.c.l.b16 %v100
    %v167 = vunpack.c.h.b16 %v100
    %v168 = vunpack.c.l.b16 %v101
    %v169 = vunpack.c.h.b16 %v101
    %v170 = vunpack.c.l.b16 %v102
    %v171 = vunpack.c.h.b16 %v102
    %v172 = vunpack.c.l.b16 %v103
    %v173 = vunpack.c.h.b16 %v103
    %v174 = vunpack.c.l.b16 %v104
    %v175 = vunpack.c.h.b16 %v104
    %v176 = vunpack.c.l.b16 %v105
    %v177 = vunpack.c.h.b16 %v105
    %v178 = vunpack.c.l.b16 %v106
    %v179 = vunpack.c.h.b16 %v106
    %v180 = vunpack.c.l.b16 %v107
    %v181 = vunpack.c.h.b16 %v107
    %v182 = vunpack.c.l.b16 %v108
    %v183 = vunpack.c.h.b16 %v108
    %v184 = vunpack.c.l.b16 %v109
    %v185 = vunpack.c.h.b16 %v109
    %v186 = vunpack.c.l.b16 %v110
    %v187 = vunpack.c.h.b16 %v110
    %v188 = vunpack.c.l.b16 %v111
    %v189 = vunpack.c.h.b16 %v111
    %v190 = vunpack.c.l.b16 %v112
    %v191 = vunpack.c.h.b16 %v112
    %v192 = vunpack.c.l.b16 %v113
    %v193 = vunpack.c.h.b16 %v113
    %v194 = vunpack.c.l.b16 %v114
    %v195 = vunpack.c.h.b16 %v114
    %v196 = vunpack.c.l.b16 %v115
    %v197 = vunpack.c.h.b16 %v115
    %v198 = vunpack.c.l.b16 %v116
    %v199 = vunpack.c.h.b16 %v116
    %v200 = vunpack.c.l.b16 %v117
    %v201 = vunpack.c.h.b16 %v117
    %v202 = vunpack.c.l.b16 %v118
    %v203 = vunpack.c.h.b16 %v118
    %v204 = vunpack.c.l.b16 %v119
    %v205 = vunpack.c.h.b16 %v119
    %v206 = vunpack.c.l.b16 %v120
    %v207 = vunpack.c.h.b16 %v120
    %v208 = vunpack.c.l.b16 %v121
    %v209 = vunpack.c.h.b16 %v121
    %v210 = vunpack.c.l.b16 %v122
    %v211 = vunpack.c.h.b16 %v122
    %v212 = vunpack.c.l.b16 %v123
    %v213 = vunpack.c.h.b16 %v123
    %v214 = vpack.c.b16 %v158, %v154
    %v215 = vpack.c.b16 %v159, %v155
    %v216 = vpack.c.b16 %v160, %v156
    %v217 = vpack.c.b16 %v161, %v157
    %v218 = vpack.c.b16 %v166, %v162
    %v219 = vpack.c.b16 %v167, %v163
    %v220 = vpack.c.b16 %v168, %v164
    %v221 = vpack.c.b16 %v169, %v165
    %v222 = vpack.c.b16 %v174, %v170
    %v223 = vpack.c.b16 %v175, %v171
    %v224 = vpack.c.b16 %v176, %v172
    %v225 = vpack.c.b16 %v177, %v173
    %v226 = vpack.c.b16 %v182, %v178
    %v227 = vpack.c.b16 %v183, %v179
    %v228 = vpack.c.b16 %v184, %v180
    %v229 = vpack.c.b16 %v185, %v181
    %v230 = vpack.c.b16 %v190, %v186
    %v231 = vpack.c.b16 %v191, %v187
    %v232 = vpack.c.b16 %v192, %v188
    %v233 = vpack.c.b16 %v193, %v189
    %v234 = vpack.c.b16 %v198, %v194
    %v235 = vpack.c.b16 %v199, %v195
    %v236 = vpack.c.b16 %v200, %v196
    %v237 = vpack.c.b16 %v201, %v197
    %v238 = vpack.c.b16 %v206, %v202
    %v239 = vpack.c.b16 %v207, %v203
    %v240 = vpack.c.b16 %v208, %v204
    %v241 = vpack.c.b16 %v209, %v205
    %v242 = vpack.c.b16 %v210, %v210
    %v243 = vpack.c.b16 %v211, %v211
    %v244 = vpack.c.b16 %v212, %v212
    %v245 = vpack.c.b16 %v213, %v213
    %vm274 = vcmask 982016
    %v276 = vsel %vm274, %v91, 0
    %v279 = vsel %vm274, %v92, 0
    %v282 = vsel %vm274, %v93, 0
    %vm284 = vcmask 1043456
    %v286 = vsel %vm284, %v242, 0
    %v289 = vsel %vm284, %v243, 0
    %v292 = vsel %vm284, %v244, 0
    %v295 = vsel %vm284, %v245, 0
    %297 = vmatprep.subr.bf16.mxu0 %v215
    %298 = vmatpush1.bf16.msra.mxu0 %v214
    %299 = vmatprep.subr.bf16.mxu0 %v219
    %300 = vmatpush1.bf16.msra.mxu0 %v218
    %301 = vmatprep.subr.bf16.mxu0 %v223
    %302 = vmatpush1.bf16.msra.mxu0 %v222
    %303 = vmatprep.subr.bf16.mxu0 %v227
    %304 = vmatpush1.bf16.msra.mxu0 %v226
    %305 = vmatprep.subr.bf16.mxu0 %v231
    %306 = vmatpush1.bf16.msra.mxu0 %v230
    %307 = vmatprep.subr.bf16.mxu0 %v235
    %308 = vmatpush1.bf16.msra.mxu0 %v234
    %309 = vmatprep.subr.bf16.mxu0 %v239
    %310 = vmatpush1.bf16.msra.mxu0 %v238
    %311 = vmatprep.subr.bf16.mxu0 %v289
    %312 = vmatpush1.bf16.msra.mxu0 %v286
    %313 = vmatprep.subr.bf16.mxu0 0
    %314 = vmatpush1.bf16.msra.mxu0 0
    %315 = vmatprep.subr.bf16.mxu0 0
    %316 = vmatpush1.bf16.msra.mxu0 0
    %317 = vmatprep.subr.bf16.mxu0 0
    %318 = vmatpush1.bf16.msra.mxu0 0
    %319 = vmatprep.subr.bf16.mxu0 0
    %320 = vmatpush1.bf16.msra.mxu0 0
    %321 = vmatprep.subr.bf16.mxu0 0
    %322 = vmatpush1.bf16.msra.mxu0 0
    %323 = vmatprep.subr.bf16.mxu0 0
    %324 = vmatpush1.bf16.msra.mxu0 0
    %325 = vmatprep.subr.bf16.mxu0 0
    %326 = vmatpush1.bf16.msra.mxu0 0
    %327 = vmatprep.subr.bf16.mxu0 0
    %328 = vmatpush1.bf16.msra.mxu0 0
    %329 = vmatprep.mubr.bf16.mxu0 0
    %330 = vmatmul.mubr.bf16.gmra.mrb[0].mxu0 %v276
    %v331 = vpop.f32.mrb[0].mxu0
    %v332 = vadd.f32 0.0, %v331
    %v333 = vpop.f32.mrb[0].mxu0
    %v334 = vadd.f32 0.0, %v333
    %v335 = vpop.f32.mrb[0].mxu0
    %v336 = vadd.f32 0.0, %v335
    %v337 = vpop.f32.mrb[0].mxu0
    %v338 = vadd.f32 0.0, %v337
    %339 = vmatprep.mubr.bf16.mxu0 0
    %340 = vmatmul.mubr.bf16.gmra.mrb[0].mxu0 %v279
    %v341 = vpop.f32.mrb[0].mxu0
    %v342 = vadd.f32 0.0, %v341
    %v343 = vpop.f32.mrb[0].mxu0
    %v344 = vadd.f32 0.0, %v343
    %v345 = vpop.f32.mrb[0].mxu0
    %v346 = vadd.f32 0.0, %v345
    %v347 = vpop.f32.mrb[0].mxu0
    %v348 = vadd.f32 0.0, %v347
    %349 = vmatprep.mubr.bf16.mxu0 0
    %350 = vmatmul.mubr.bf16.gmra.mrb[0].mxu0 %v282
    %v351 = vpop.f32.mrb[0].mxu0
    %v352 = vadd.f32 0.0, %v351
    %v353 = vpop.f32.mrb[0].mxu0
    %v354 = vadd.f32 0.0, %v353
    %v355 = vpop.f32.mrb[0].mxu0
    %v356 = vadd.f32 0.0, %v355
    %v357 = vpop.f32.mrb[0].mxu0
    %v358 = vadd.f32 0.0, %v357
    %359 = vdwg.mxu0
    %360 = vmatprep.subr.bf16.mxu0 %v217
    %361 = vmatpush1.bf16.msra.mxu0 %v216
    %362 = vmatprep.subr.bf16.mxu0 %v221
    %363 = vmatpush1.bf16.msra.mxu0 %v220
    %364 = vmatprep.subr.bf16.mxu0 %v225
    %365 = vmatpush1.bf16.msra.mxu0 %v224
    %366 = vmatprep.subr.bf16.mxu0 %v229
    %367 = vmatpush1.bf16.msra.mxu0 %v228
    %368 = vmatprep.subr.bf16.mxu0 %v233
    %369 = vmatpush1.bf16.msra.mxu0 %v232
    %370 = vmatprep.subr.bf16.mxu0 %v237
    %371 = vmatpush1.bf16.msra.mxu0 %v236
    %372 = vmatprep.subr.bf16.mxu0 %v241
    %373 = vmatpush1.bf16.msra.mxu0 %v240
    %374 = vmatprep.subr.bf16.mxu0 %v295
    %375 = vmatpush1.bf16.msra.mxu0 %v292
    %376 = vmatprep.subr.bf16.mxu0 0
    %377 = vmatpush1.bf16.msra.mxu0 0
    %378 = vmatprep.subr.bf16.mxu0 0
    %379 = vmatpush1.bf16.msra.mxu0 0
    %380 = vmatprep.subr.bf16.mxu0 0
    %381 = vmatpush1.bf16.msra.mxu0 0
    %382 = vmatprep.subr.bf16.mxu0 0
    %383 = vmatpush1.bf16.msra.mxu0 0
    %384 = vmatprep.subr.bf16.mxu0 0
    %385 = vmatpush1.bf16.msra.mxu0 0
    %386 = vmatprep.subr.bf16.mxu0 0
    %387 = vmatpush1.bf16.msra.mxu0 0
    %388 = vmatprep.subr.bf16.mxu0 0
    %389 = vmatpush1.bf16.msra.mxu0 0
    %390 = vmatprep.subr.bf16.mxu0 0
    %391 = vmatpush1.bf16.msra.mxu0 0
    %392 = vmatprep.mubr.bf16.mxu0 0
    %393 = vmatmul.mubr.bf16.gmra.mrb[0].mxu0 %v276
    %v394 = vpop.f32.mrb[0].mxu0
    %v395 = vadd.f32 0.0, %v394
    %v396 = vpop.f32.mrb[0].mxu0
    %v397 = vadd.f32 0.0, %v396
    %v398 = vpop.f32.mrb[0].mxu0
    %v399 = vadd.f32 0.0, %v398
    %v400 = vpop.f32.mrb[0].mxu0
    %v401 = vadd.f32 0.0, %v400
    %402 = vmatprep.mubr.bf16.mxu0 0
    %403 = vmatmul.mubr.bf16.gmra.mrb[0].mxu0 %v279
    %v404 = vpop.f32.mrb[0].mxu0
    %v405 = vadd.f32 0.0, %v404
    %v406 = vpop.f32.mrb[0].mxu0
    %v407 = vadd.f32 0.0, %v406
    %v408 = vpop.f32.mrb[0].mxu0
    %v409 = vadd.f32 0.0, %v408
    %v410 = vpop.f32.mrb[0].mxu0
    %v411 = vadd.f32 0.0, %v410
    %412 = vmatprep.mubr.bf16.mxu0 0
    %413 = vmatmul.mubr.bf16.gmra.mrb[0].mxu0 %v282
    %v414 = vpop.f32.mrb[0].mxu0
    %v415 = vadd.f32 0.0, %v414
    %v416 = vpop.f32.mrb[0].mxu0
    %v417 = vadd.f32 0.0, %v416
    %v418 = vpop.f32.mrb[0].mxu0
    %v419 = vadd.f32 0.0, %v418
    %v420 = vpop.f32.mrb[0].mxu0
    %v421 = vadd.f32 0.0, %v420
    %422 = vdwg.mxu0
    %v423 = vmax.f32 %v332, %v336
    %v424 = vmax.f32 %v334, %v338
    %v425 = vmax.f32 %v395, %v399
    %v426 = vmax.f32 %v397, %v401
    %v427 = vmax.f32 %v423, %v342
    %v428 = vmax.f32 %v424, %v344
    %v429 = vmax.f32 %v425, %v405
    %v430 = vmax.f32 %v426, %v407
    %v431 = vmax.f32 %v427, %v346
    %v432 = vmax.f32 %v428, %v348
    %v433 = vmax.f32 %v429, %v409
    %v434 = vmax.f32 %v430, %v411
    %v435 = vmax.f32 %v431, %v352
    %v436 = vmax.f32 %v432, %v354
    %v437 = vmax.f32 %v433, %v415
    %v438 = vmax.f32 %v434, %v417
    %v439 = vmax.f32 %v435, %v356
    %v440 = vmax.f32 %v436, %v358
    %v441 = vmax.f32 %v437, %v419
    %v442 = vmax.f32 %v438, %v421
    %v443 = vld [vmem:[%s2] sm:$0xf]
    %v445 = vlaneseq
    %v446 = vshrl.u32 %v445, 7
    %v447 = vsub.s32 0, %v446
    %v448 = vrot.slane %v443, %v447
    %v449 = vlaneseq
    %v450 = vshrl.u32 %v449, 7
    %v451 = vsub.s32 1, %v450
    %v452 = vrot.slane %v443, %v451
    %v453 = vlaneseq
    %v454 = vshrl.u32 %v453, 7
    %v455 = vsub.s32 2, %v454
    %v456 = vrot.slane %v443, %v455
    %v457 = vlaneseq
    %v458 = vshrl.u32 %v457, 7
    %v459 = vsub.s32 3, %v458
    %v460 = vrot.slane %v443, %v459
    %v465 = vadd.f32 %v439, %v448
    %v466 = vadd.f32 %v440, %v452
    %v467 = vadd.f32 %v441, %v456
    %v468 = vadd.f32 %v442, %v460
    %469 = vst [vmem:[#allocation2] sm:$0xff] %v465
    %470 = vst [vmem:[#allocation2 + $0x8] sm:$0xff] %v466
    %471 = vst [vmem:[#allocation2 + $0x10] sm:$0xff] %v467
    %vm472 = vcmask 130048
    %473 = vst.msk [vmem:[#allocation2 + $0x18] sm:$0xff] %vm472, %v468
    // Predicated region
    $region14: #{tpu_custom_call.1} parent=1 // pred_check
      _
    $region15: #{tpu_custom_call.1} parent=1 // pred_check_branch
      %475 = sbr.rel (0) target = $region17
    $region16: #{tpu_custom_call.1} parent=1 // pred_region
      %s477 = ssub.s32 512, 512
      %478 = vsyncadd [#allocation3], %s477
      %s480 = sshll.u32 [#allocation2], 4
      %s481 = int_to_ptr.vmem [resolvable:$true] %s480
      %483 = dma.vmem_to_hbm [thread:$0]  %s481, 512, %s3, [#allocation3]
    $region17: #{tpu_custom_call.1} parent=1 // pred_fallthru
      _
    // Predicated region
    $region18: #{tpu_custom_call.1} parent=1 // pred_check
      _
    $region19: #{tpu_custom_call.1} parent=1 // pred_check_branch
      %485 = sbr.rel (0) target = $region21
    $region20: #{tpu_custom_call.1} parent=1 // pred_region
      %486 = dma.done [#allocation3], 512
    $region21: #{tpu_custom_call.1} parent=1 // pred_fallthru
      _
    %487 = vsyncpa [#allocation3], 1

</llo_original>
